<compile_context>
chip_gen: v7x
topology: tpu7x:2x2x1
jax: 0.10.0
libtpu: 0.0.40
codegen_flags: <defaults>
</compile_context>

<pallas_src>
import math

import numpy as np

import jax
import jax.numpy as jnp
from jax.experimental import pallas as pl
from jax.experimental.pallas import tpu as pltpu

# Module hyper-params (consistent with MLP(profile=[32, 64, 64, 16])).
PROFILE = [32, 64, 64, 16]
N_LAYERS = len(PROFILE) - 1          # 3 Linear layers (last one has no ReLU)
BATCH = 256                          # instances, gridded in tiles of TB rows
F_PAD = 128                          # common padded feature width (lane-dense)

assert max(PROFILE) <= F_PAD
assert PROFILE[0] % 8 == 0           # sublane-aligned slice of the first weight tile


def _num_tensorcores() -> int:
    """2 TensorCores per chip on v7x, 1 on v5e/v6e (fallback: 1)."""
    try:
        kind = jax.devices()[0].device_kind.lower()
    except Exception:
        return 1
    return 2 if ("v7" in kind or "7x" in kind) else 1


def pack_params(w_list, b_list):
    """Zero-pad & stack per-layer params into single slabs. Call ONCE at init."""
    w_stack = np.zeros((N_LAYERS, F_PAD, F_PAD), np.float32)
    b_stack = np.zeros((N_LAYERS, 1, F_PAD), np.float32)
    for l in range(N_LAYERS):
        fi, fo = PROFILE[l], PROFILE[l + 1]
        w_stack[l, :fi, :fo] = np.asarray(w_list[l], np.float32)
        b_stack[l, 0, :fo] = np.asarray(b_list[l], np.float32)
    # bf16 weights: native MXU dtype, half the weight DMA. Bias stays f32.
    return jnp.asarray(w_stack, jnp.bfloat16), jnp.asarray(b_stack, jnp.float32)


def mlp_kernel(x_ref, w_ref, b_ref, o_ref):
    # x_ref: (TB, PROFILE[0])           unpadded input tile (f32)
    # w_ref: (N_LAYERS, F_PAD, F_PAD)   zero-padded bf16 weight stack
    # b_ref: (N_LAYERS, 1, F_PAD)       zero-padded f32 bias stack
    # o_ref: (TB, F_PAD)                lane-dense output slab
    #
    # First layer: slice the weight tile down to PROFILE[0] rows (sublane slice,
    # multiple of 8 -> free) so the matmul K is exactly 32.
    w0 = w_ref[0][:PROFILE[0], :]
    z = jnp.dot(x_ref[...].astype(jnp.bfloat16), w0,
                preferred_element_type=jnp.float32) + b_ref[0]
    h = jnp.maximum(z, 0.0)

    # Remaining hidden layers: Linear + ReLU (Dropout == identity at inference).
    # Static python loop -> fully unrolled; whole 128x128 tile loads.
    for l in range(1, N_LAYERS - 1):
        z = jnp.dot(h.astype(jnp.bfloat16), w_ref[l],
                    preferred_element_type=jnp.float32) + b_ref[l]
        h = jnp.maximum(z, 0.0)

    # Final Linear + sigmoid. Padded columns come out as sigmoid(0)=0.5 and are
    # discarded by the wrapper slice.
    z = jnp.dot(h.astype(jnp.bfloat16), w_ref[N_LAYERS - 1],
                preferred_element_type=jnp.float32) + b_ref[N_LAYERS - 1]
    o_ref[...] = jax.nn.sigmoid(z)


def make_mlp_forward(w_list, b_list):
    """Pack params once; return a jitted forward(x) -> (BATCH, PROFILE[-1])."""
    w_stack, b_stack = pack_params(w_list, b_list)

    # Grid sizing: one 128-row tile per TensorCore on v7x (2 TC), a single
    # 256-row step on single-TC v5e/v6e (saves one fixed per-step overhead).
    n_tc = _num_tensorcores()
    tb = BATCH // n_tc if (BATCH % n_tc == 0 and BATCH // n_tc >= 8) else BATCH
    grid = (BATCH // tb,)

    flops = 2 * BATCH * (PROFILE[0] * F_PAD + (N_LAYERS - 1) * F_PAD * F_PAD)
    bytes_accessed = (BATCH * PROFILE[0] * 4            # x
                      + int(w_stack.size) * 2           # bf16 weights
                      + int(b_stack.size) * 4           # f32 biases
                      + BATCH * F_PAD * 4)               # output slab
    cost = pl.CostEstimate(flops=flops,
                           transcendentals=BATCH * F_PAD,   # sigmoid
                           bytes_accessed=bytes_accessed)

    kernel_fn = pl.pallas_call(
        mlp_kernel,
        out_shape=jax.ShapeDtypeStruct((BATCH, F_PAD), jnp.float32),
        grid_spec=pltpu.PrefetchScalarGridSpec(
            num_scalar_prefetch=0,
            grid=grid,
            in_specs=[
                # x: last dim (32) equals the full array dim -> (8,128) rule OK.
                pl.BlockSpec((tb, PROFILE[0]), lambda i: (i, 0)),
                # Weight/bias index maps are grid-invariant; the default
                # double-buffer costs ~0.2 MiB here, so no Buffered(1) needed.
                pl.BlockSpec((N_LAYERS, F_PAD, F_PAD), lambda i: (0, 0, 0)),
                pl.BlockSpec((N_LAYERS, 1, F_PAD), lambda i: (0, 0, 0)),
            ],
            out_specs=pl.BlockSpec((tb, F_PAD), lambda i: (i, 0)),
        ),
        compiler_params=pltpu.CompilerParams(
            dimension_semantics=("parallel",)),
        cost_estimate=cost,
    )

    @jax.jit
    def forward(x):
        out_pad = kernel_fn(x, w_stack, b_stack)
        return out_pad[:, :PROFILE[-1]]          # cheap XLA slice of valid cols

    return forward


def reference_forward(x, w_list, b_list):
    """Pure-JAX (f32) transcription of MLP.forward (dropout=0 / eval)."""
    h = x
    for l in range(N_LAYERS - 1):
        h = jnp.maximum(h @ w_list[l] + b_list[l], 0.0)
    z = h @ w_list[N_LAYERS - 1] + b_list[N_LAYERS - 1]
    return jax.nn.sigmoid(z)


if __name__ == "__main__":
    key = jax.random.PRNGKey(0)
    keys = jax.random.split(key, 1 + 2 * N_LAYERS)

    x = jax.random.normal(keys[0], (BATCH, PROFILE[0]), dtype=jnp.float32)

    w_list, b_list = [], []
    for l in range(N_LAYERS):
        fi, fo = PROFILE[l], PROFILE[l + 1]
        w = jax.random.normal(keys[1 + 2 * l], (fi, fo),
                              dtype=jnp.float32) / math.sqrt(fi)
        b = 0.1 * jax.random.normal(keys[2 + 2 * l], (fo,), dtype=jnp.float32)
        w_list.append(w)
        b_list.append(b)

    forward = make_mlp_forward(w_list, b_list)   # packs params once (init time)
    out = jax.block_until_ready(forward(x))

    ref = reference_forward(x, w_list, b_list)
    assert out.shape == (BATCH, PROFILE[-1]), out.shape
    # bf16 weights/activations in the matmul -> relaxed tolerance vs f32 ref.
    err = float(jnp.max(jnp.abs(out - ref)))
    assert err < 2e-2, err

    print("KERNEL_OK")
</pallas_src>

<mosaic_0001>
module attributes {stable_mosaic.version = 11 : i64} {
  func.func @mlp_kernel(%arg0: i32, %arg1: memref<256x32xf32, #tpu.memory_space<vmem>>, %arg2: memref<3x128x128xbf16, #tpu.memory_space<vmem>>, %arg3: memref<3x1x128xf32, #tpu.memory_space<vmem>>, %arg4: memref<256x128xf32, #tpu.memory_space<vmem>>) attributes {dimension_semantics = [#tpu.dimension_semantics<parallel>], iteration_bounds = array<i64: 1>, scalar_prefetch = 0 : i64, scratch_operands = 0 : i64, tpu.core_type = #tpu.core_type<tc>, window_params = [{transform_indices = @transform_0, window_bounds = array<i64: 256, 32>}, {pipeline_mode = #tpu.pipeline_mode<synchronous>, transform_indices = @transform_1, window_bounds = array<i64: 3, 128, 128>}, {pipeline_mode = #tpu.pipeline_mode<synchronous>, transform_indices = @transform_2, window_bounds = array<i64: 3, 1, 128>}, {transform_indices = @transform_3, window_bounds = array<i64: 256, 128>}]} {
    %c0 = arith.constant 0 : index
    %c0_0 = arith.constant 0 : index
    %c0_1 = arith.constant 0 : index
    %0 = vector.load %arg2[%c0, %c0_0, %c0_1] : memref<3x128x128xbf16, #tpu.memory_space<vmem>>, vector<1x128x128xbf16>
    %1 = vector.shape_cast %0 : vector<1x128x128xbf16> to vector<128x128xbf16>
    %2 = vector.extract_strided_slice %1 {offsets = [0, 0], sizes = [32, 128], strides = [1, 1]} : vector<128x128xbf16> to vector<32x128xbf16>
    %c0_2 = arith.constant 0 : index
    %c0_3 = arith.constant 0 : index
    %3 = vector.load %arg1[%c0_2, %c0_3] : memref<256x32xf32, #tpu.memory_space<vmem>>, vector<256x32xf32>
    %4 = arith.truncf %3 : vector<256x32xf32> to vector<256x32xbf16>
    %cst = arith.constant dense<0.000000e+00> : vector<256x128xf32>
    %5 = tpu.matmul %4, %2, %cst {dimension_numbers = #tpu.dot_dimension_numbers<[1], [0], [0], [1], [0, 0, 1, 1], [], []>} : vector<256x32xbf16>, vector<32x128xbf16>, vector<256x128xf32> -> vector<256x128xf32>
    %c0_4 = arith.constant 0 : index
    %c0_5 = arith.constant 0 : index
    %c0_6 = arith.constant 0 : index
    %6 = vector.load %arg3[%c0_4, %c0_5, %c0_6] : memref<3x1x128xf32, #tpu.memory_space<vmem>>, vector<1x1x128xf32>
    %7 = vector.shape_cast %6 : vector<1x1x128xf32> to vector<1x128xf32>
    %8 = vector.broadcast %7 : vector<1x128xf32> to vector<256x128xf32>
    %9 = arith.addf %5, %8 : vector<256x128xf32>
    %cst_7 = arith.constant 0.000000e+00 : f32
    %10 = vector.broadcast %cst_7 : f32 to vector<256x128xf32>
    %11 = arith.maximumf %9, %10 : vector<256x128xf32>
    %12 = arith.truncf %11 : vector<256x128xf32> to vector<256x128xbf16>
    %c1 = arith.constant 1 : index
    %c0_8 = arith.constant 0 : index
    %c0_9 = arith.constant 0 : index
    %13 = vector.load %arg2[%c1, %c0_8, %c0_9] : memref<3x128x128xbf16, #tpu.memory_space<vmem>>, vector<1x128x128xbf16>
    %14 = vector.shape_cast %13 : vector<1x128x128xbf16> to vector<128x128xbf16>
    %cst_10 = arith.constant dense<0.000000e+00> : vector<256x128xf32>
    %15 = tpu.matmul %12, %14, %cst_10 {dimension_numbers = #tpu.dot_dimension_numbers<[1], [0], [0], [1], [0, 0, 1, 1], [], []>} : vector<256x128xbf16>, vector<128x128xbf16>, vector<256x128xf32> -> vector<256x128xf32>
    %c1_11 = arith.constant 1 : index
    %c0_12 = arith.constant 0 : index
    %c0_13 = arith.constant 0 : index
    %16 = vector.load %arg3[%c1_11, %c0_12, %c0_13] : memref<3x1x128xf32, #tpu.memory_space<vmem>>, vector<1x1x128xf32>
    %17 = vector.shape_cast %16 : vector<1x1x128xf32> to vector<1x128xf32>
    %18 = vector.broadcast %17 : vector<1x128xf32> to vector<256x128xf32>
    %19 = arith.addf %15, %18 : vector<256x128xf32>
    %cst_14 = arith.constant 0.000000e+00 : f32
    %20 = vector.broadcast %cst_14 : f32 to vector<256x128xf32>
    %21 = arith.maximumf %19, %20 : vector<256x128xf32>
    %22 = arith.truncf %21 : vector<256x128xf32> to vector<256x128xbf16>
    %c2 = arith.constant 2 : index
    %c0_15 = arith.constant 0 : index
    %c0_16 = arith.constant 0 : index
    %23 = vector.load %arg2[%c2, %c0_15, %c0_16] : memref<3x128x128xbf16, #tpu.memory_space<vmem>>, vector<1x128x128xbf16>
    %24 = vector.shape_cast %23 : vector<1x128x128xbf16> to vector<128x128xbf16>
    %cst_17 = arith.constant dense<0.000000e+00> : vector<256x128xf32>
    %25 = tpu.matmul %22, %24, %cst_17 {dimension_numbers = #tpu.dot_dimension_numbers<[1], [0], [0], [1], [0, 0, 1, 1], [], []>} : vector<256x128xbf16>, vector<128x128xbf16>, vector<256x128xf32> -> vector<256x128xf32>
    %c2_18 = arith.constant 2 : index
    %c0_19 = arith.constant 0 : index
    %c0_20 = arith.constant 0 : index
    %26 = vector.load %arg3[%c2_18, %c0_19, %c0_20] : memref<3x1x128xf32, #tpu.memory_space<vmem>>, vector<1x1x128xf32>
    %27 = vector.shape_cast %26 : vector<1x1x128xf32> to vector<1x128xf32>
    %28 = vector.broadcast %27 : vector<1x128xf32> to vector<256x128xf32>
    %29 = arith.addf %25, %28 : vector<256x128xf32>
    %30 = arith.negf %29 : vector<256x128xf32>
    %31 = math.exp %30 : vector<256x128xf32>
    %cst_21 = arith.constant 1.000000e+00 : f32
    %32 = vector.broadcast %cst_21 : f32 to vector<256x128xf32>
    %33 = arith.addf %32, %31 : vector<256x128xf32>
    %34 = arith.divf %32, %33 : vector<256x128xf32>
    %c0_22 = arith.constant 0 : index
    %c0_23 = arith.constant 0 : index
    %35 = vector.load %arg4[%c0_22, %c0_23] : memref<256x128xf32, #tpu.memory_space<vmem>>, vector<256x128xf32>
    tpu.vector_store %arg4[%c0_22, %c0_23], %34 {strides = array<i32>} : memref<256x128xf32, #tpu.memory_space<vmem>>, vector<256x128xf32>,
    return
  }
  func.func @transform_0(%arg0: i32) -> (i32, i32) {
    %c0_i32 = arith.constant 0 : i32
    %c0_i32_0 = arith.constant 0 : i32
    return %arg0, %c0_i32 : i32, i32
  }
  func.func @transform_1(%arg0: i32) -> (i32, i32, i32) {
    %c0_i32 = arith.constant 0 : i32
    %c0_i32_0 = arith.constant 0 : i32
    %c0_i32_1 = arith.constant 0 : i32
    %c0_i32_2 = arith.constant 0 : i32
    return %c0_i32, %c0_i32_0, %c0_i32_1 : i32, i32, i32
  }
  func.func @transform_2(%arg0: i32) -> (i32, i32, i32) {
    %c0_i32 = arith.constant 0 : i32
    %c0_i32_0 = arith.constant 0 : i32
    %c0_i32_1 = arith.constant 0 : i32
    %c0_i32_2 = arith.constant 0 : i32
    return %c0_i32, %c0_i32_0, %c0_i32_1 : i32, i32, i32
  }
  func.func @transform_3(%arg0: i32) -> (i32, i32) {
    %c0_i32 = arith.constant 0 : i32
    %c0_i32_0 = arith.constant 0 : i32
    return %arg0, %c0_i32 : i32, i32
  }
}

</mosaic_0001>

<llo_original>
// kernel: forward.1
$region0: #{forward.1}
  #allocation0 [shape = 'u32[]', space=smem, size = 0x4, offset = 0x4, fixed_abs, tag = 'smem constant byte address 0x4 - core index']
  #allocation1 [shape = 'u32[144,128]{1,0:T(1,128)}', space=vmem, size = 0x12000, scoped, tag = 'internal scratch']
  %s0 = inlined_call_operand.vmem [shape: f32[256,32], index: 0, kind: input, shape index: {}]
  %s1 = inlined_call_operand.vmem [shape: bf16[3,128,128], index: 1, kind: input, shape index: {}]
  %s2 = inlined_call_operand.vmem [shape: f32[3,1,128], index: 2, kind: input, shape index: {}]
  %s3 = inlined_call_operand.vmem [shape: f32[256,128], index: 3, kind: output, shape index: {}]
  %s4 = sld [smem:[#allocation0]]
  $region22: #{forward.1} parent=0
    _
  %s6 = ssub.s32 1, %s4
  %s7 = scalar_select 0, %s6, %s4
  // Predicated region
  $region2: #{forward.1} parent=0 // pred_check
    _
  $region3: #{forward.1} parent=0 // pred_check_branch
    %9 = sbr.rel (0) target = $region5
  $region4: #{forward.1} parent=0 // pred_region
    _
  $region5: #{forward.1} parent=0 // pred_fallthru
    _
  // Predicated region
  $region6: #{forward.1} parent=0 // pred_check
    _
  $region7: #{forward.1} parent=0 // pred_check_branch
    %11 = sbr.rel (0) target = $region9
  $region8: #{forward.1} parent=0 // pred_region
    _
  $region9: #{forward.1} parent=0 // pred_fallthru
    _
  // Predicated region
  $region10: #{forward.1} parent=0 // pred_check
    _
  $region11: #{forward.1} parent=0 // pred_check_branch
    %13 = sbr.rel (0) target = $region13
  $region12: #{forward.1} parent=0 // pred_region
    _
  $region13: #{forward.1} parent=0 // pred_fallthru
    _
  %v15 = vld [vmem:[%s1] sm:$0xf]
  %v16 = vld [vmem:[%s1 + $0x4] sm:$0xf]
  %v17 = vld [vmem:[%s1 + $0x8] sm:$0xf]
  %v18 = vld [vmem:[%s1 + $0xc] sm:$0xf]
  %v19 = vld [vmem:[%s0] sm:$0xff]
  %v20 = vld [vmem:[%s0 + $0x8] sm:$0xff]
  %v21 = vld [vmem:[%s0 + $0x10] sm:$0xff]
  %v22 = vld [vmem:[%s0 + $0x18] sm:$0xff]
  %v23 = vld [vmem:[%s0 + $0x20] sm:$0xff]
  %v24 = vld [vmem:[%s0 + $0x28] sm:$0xff]
  %v25 = vld [vmem:[%s0 + $0x30] sm:$0xff]
  %v26 = vld [vmem:[%s0 + $0x38] sm:$0xff]
  %v27 = vld [vmem:[%s0 + $0x40] sm:$0xff]
  %v28 = vld [vmem:[%s0 + $0x48] sm:$0xff]
  %v29 = vld [vmem:[%s0 + $0x50] sm:$0xff]
  %v30 = vld [vmem:[%s0 + $0x58] sm:$0xff]
  %v31 = vld [vmem:[%s0 + $0x60] sm:$0xff]
  %v32 = vld [vmem:[%s0 + $0x68] sm:$0xff]
  %v33 = vld [vmem:[%s0 + $0x70] sm:$0xff]
  %v34 = vld [vmem:[%s0 + $0x78] sm:$0xff]
  %v35 = vld [vmem:[%s0 + $0x80] sm:$0xff]
  %v36 = vld [vmem:[%s0 + $0x88] sm:$0xff]
  %v37 = vld [vmem:[%s0 + $0x90] sm:$0xff]
  %v38 = vld [vmem:[%s0 + $0x98] sm:$0xff]
  %v39 = vld [vmem:[%s0 + $0xa0] sm:$0xff]
  %v40 = vld [vmem:[%s0 + $0xa8] sm:$0xff]
  %v41 = vld [vmem:[%s0 + $0xb0] sm:$0xff]
  %v42 = vld [vmem:[%s0 + $0xb8] sm:$0xff]
  %v43 = vld [vmem:[%s0 + $0xc0] sm:$0xff]
  %v44 = vld [vmem:[%s0 + $0xc8] sm:$0xff]
  %v45 = vld [vmem:[%s0 + $0xd0] sm:$0xff]
  %v46 = vld [vmem:[%s0 + $0xd8] sm:$0xff]
  %v47 = vld [vmem:[%s0 + $0xe0] sm:$0xff]
  %v48 = vld [vmem:[%s0 + $0xe8] sm:$0xff]
  %v49 = vld [vmem:[%s0 + $0xf0] sm:$0xff]
  %v50 = vld [vmem:[%s0 + $0xf8] sm:$0xff]
  %v51 = vpack.c.bf16 %v20, %v19
  %v52 = vpack.c.bf16 %v22, %v21
  %v53 = vpack.c.bf16 %v24, %v23
  %v54 = vpack.c.bf16 %v26, %v25
  %v55 = vpack.c.bf16 %v28, %v27
  %v56 = vpack.c.bf16 %v30, %v29
  %v57 = vpack.c.bf16 %v32, %v31
  %v58 = vpack.c.bf16 %v34, %v33
  %v59 = vpack.c.bf16 %v36, %v35
  %v60 = vpack.c.bf16 %v38, %v37
  %v61 = vpack.c.bf16 %v40, %v39
  %v62 = vpack.c.bf16 %v42, %v41
  %v63 = vpack.c.bf16 %v44, %v43
  %v64 = vpack.c.bf16 %v46, %v45
  %v65 = vpack.c.bf16 %v48, %v47
  %v66 = vpack.c.bf16 %v50, %v49
  %v67 = vld [vmem:[%s2] sm:$0x1]
  %v69 = vlaneseq
  %v70 = vshrl.u32 %v69, 7
  %v71 = vsub.s32 0, %v70
  %v72 = vrot.slane %v67, %v71
  %v78 = vunpack.c.l.b16 %v15
  %v79 = vunpack.c.l.b16 %v16
  %v80 = vunpack.c.l.b16 %v17
  %v81 = vunpack.c.l.b16 %v18
  %v82 = vpack.c.b16 %v79, %v78
  %v83 = vpack.c.b16 %v81, %v80
  %vm86 = vcmask 261120
  %v88 = vsel %vm86, %v51, 0
  %v91 = vsel %vm86, %v52, 0
  %v94 = vsel %vm86, %v53, 0
  %v97 = vsel %vm86, %v54, 0
  %v100 = vsel %vm86, %v55, 0
  %v103 = vsel %vm86, %v56, 0
  %v106 = vsel %vm86, %v57, 0
  %v109 = vsel %vm86, %v58, 0
  %v112 = vsel %vm86, %v59, 0
  %v115 = vsel %vm86, %v60, 0
  %v118 = vsel %vm86, %v61, 0
  %v121 = vsel %vm86, %v62, 0
  %v124 = vsel %vm86, %v63, 0
  %v127 = vsel %vm86, %v64, 0
  %v130 = vsel %vm86, %v65, 0
  %v133 = vsel %vm86, %v66, 0
  %135 = vmatprep.subr.bf16.mxu0 0
  %136 = vmatpush1.bf16.msra.mxu0 %v82
  %137 = vmatprep.subr.bf16.mxu0 0
  %138 = vmatpush1.bf16.msra.mxu0 %v83
  %139 = vmatprep.subr.bf16.mxu0 0
  %140 = vmatpush1.bf16.msra.mxu0 0
  %141 = vmatprep.subr.bf16.mxu0 0
  %142 = vmatpush1.bf16.msra.mxu0 0
  %143 = vmatprep.subr.bf16.mxu0 0
  %144 = vmatpush1.bf16.msra.mxu0 0
  %145 = vmatprep.subr.bf16.mxu0 0
  %146 = vmatpush1.bf16.msra.mxu0 0
  %147 = vmatprep.subr.bf16.mxu0 0
  %148 = vmatpush1.bf16.msra.mxu0 0
  %149 = vmatprep.subr.bf16.mxu0 0
  %150 = vmatpush1.bf16.msra.mxu0 0
  %151 = vmatprep.subr.bf16.mxu0 0
  %152 = vmatpush1.bf16.msra.mxu0 0
  %153 = vmatprep.subr.bf16.mxu0 0
  %154 = vmatpush1.bf16.msra.mxu0 0
  %155 = vmatprep.subr.bf16.mxu0 0
  %156 = vmatpush1.bf16.msra.mxu0 0
  %157 = vmatprep.subr.bf16.mxu0 0
  %158 = vmatpush1.bf16.msra.mxu0 0
  %159 = vmatprep.subr.bf16.mxu0 0
  %160 = vmatpush1.bf16.msra.mxu0 0
  %161 = vmatprep.subr.bf16.mxu0 0
  %162 = vmatpush1.bf16.msra.mxu0 0
  %163 = vmatprep.subr.bf16.mxu0 0
  %164 = vmatpush1.bf16.msra.mxu0 0
  %165 = vmatprep.subr.bf16.mxu0 0
  %166 = vmatpush1.bf16.msra.mxu0 0
  %167 = vmatprep.mubr.bf16.mxu0 0
  %168 = vmatmul.mubr.bf16.gmra.mrb[0].mxu0 %v88
  %v169 = vpop.f32.mrb[0].mxu0
  %v170 = vadd.f32 %v72, %v169
  %v171 = vpop.f32.mrb[0].mxu0
  %v172 = vpop.f32.mrb[0].mxu0
  %v173 = vadd.f32 %v72, %v172
  %v174 = vpop.f32.mrb[0].mxu0
  %175 = vmatprep.mubr.bf16.mxu0 0
  %176 = vmatmul.mubr.bf16.gmra.mrb[0].mxu0 %v91
  %v177 = vpop.f32.mrb[0].mxu0
  %v178 = vadd.f32 %v72, %v177
  %v179 = vpop.f32.mrb[0].mxu0
  %v180 = vpop.f32.mrb[0].mxu0
  %v181 = vadd.f32 %v72, %v180
  %v182 = vpop.f32.mrb[0].mxu0
  %183 = vmatprep.mubr.bf16.mxu0 0
  %184 = vmatmul.mubr.bf16.gmra.mrb[0].mxu0 %v94
  %v185 = vpop.f32.mrb[0].mxu0
  %v186 = vadd.f32 %v72, %v185
  %v187 = vpop.f32.mrb[0].mxu0
  %v188 = vpop.f32.mrb[0].mxu0
  %v189 = vadd.f32 %v72, %v188
  %v190 = vpop.f32.mrb[0].mxu0
  %191 = vmatprep.mubr.bf16.mxu0 0
  %192 = vmatmul.mubr.bf16.gmra.mrb[0].mxu0 %v97
  %v193 = vpop.f32.mrb[0].mxu0
  %v194 = vadd.f32 %v72, %v193
  %v195 = vpop.f32.mrb[0].mxu0
  %v196 = vpop.f32.mrb[0].mxu0
  %v197 = vadd.f32 %v72, %v196
  %v198 = vpop.f32.mrb[0].mxu0
  %199 = vmatprep.mubr.bf16.mxu0 0
  %200 = vmatmul.mubr.bf16.gmra.mrb[0].mxu0 %v100
  %v201 = vpop.f32.mrb[0].mxu0
  %v202 = vadd.f32 %v72, %v201
  %v203 = vpop.f32.mrb[0].mxu0
  %v204 = vpop.f32.mrb[0].mxu0
  %v205 = vadd.f32 %v72, %v204
  %v206 = vpop.f32.mrb[0].mxu0
  %207 = vmatprep.mubr.bf16.mxu0 0
  %208 = vmatmul.mubr.bf16.gmra.mrb[0].mxu0 %v103
  %v209 = vpop.f32.mrb[0].mxu0
  %v210 = vadd.f32 %v72, %v209
  %v211 = vpop.f32.mrb[0].mxu0
  %v212 = vpop.f32.mrb[0].mxu0
  %v213 = vadd.f32 %v72, %v212
  %v214 = vpop.f32.mrb[0].mxu0
  %215 = vmatprep.mubr.bf16.mxu0 0
  %216 = vmatmul.mubr.bf16.gmra.mrb[0].mxu0 %v106
  %v217 = vpop.f32.mrb[0].mxu0
  %v218 = vadd.f32 %v72, %v217
  %v219 = vpop.f32.mrb[0].mxu0
  %v220 = vpop.f32.mrb[0].mxu0
  %v221 = vadd.f32 %v72, %v220
  %v222 = vpop.f32.mrb[0].mxu0
  %223 = vmatprep.mubr.bf16.mxu0 0
  %224 = vmatmul.mubr.bf16.gmra.mrb[0].mxu0 %v109
  %v225 = vpop.f32.mrb[0].mxu0
  %v226 = vadd.f32 %v72, %v225
  %v227 = vpop.f32.mrb[0].mxu0
  %v228 = vpop.f32.mrb[0].mxu0
  %v229 = vadd.f32 %v72, %v228
  %v230 = vpop.f32.mrb[0].mxu0
  %231 = vmatprep.mubr.bf16.mxu0 0
  %232 = vmatmul.mubr.bf16.gmra.mrb[0].mxu0 %v112
  %v233 = vpop.f32.mrb[0].mxu0
  %v234 = vadd.f32 %v72, %v233
  %v235 = vpop.f32.mrb[0].mxu0
  %v236 = vpop.f32.mrb[0].mxu0
  %v237 = vadd.f32 %v72, %v236
  %v238 = vpop.f32.mrb[0].mxu0
  %239 = vmatprep.mubr.bf16.mxu0 0
  %240 = vmatmul.mubr.bf16.gmra.mrb[0].mxu0 %v115
  %v241 = vpop.f32.mrb[0].mxu0
  %v242 = vadd.f32 %v72, %v241
  %v243 = vpop.f32.mrb[0].mxu0
  %v244 = vpop.f32.mrb[0].mxu0
  %v245 = vadd.f32 %v72, %v244
  %v246 = vpop.f32.mrb[0].mxu0
  %247 = vmatprep.mubr.bf16.mxu0 0
  %248 = vmatmul.mubr.bf16.gmra.mrb[0].mxu0 %v118
  %v249 = vpop.f32.mrb[0].mxu0
  %v250 = vadd.f32 %v72, %v249
  %v251 = vpop.f32.mrb[0].mxu0
  %v252 = vpop.f32.mrb[0].mxu0
  %v253 = vadd.f32 %v72, %v252
  %v254 = vpop.f32.mrb[0].mxu0
  %255 = vmatprep.mubr.bf16.mxu0 0
  %256 = vmatmul.mubr.bf16.gmra.mrb[0].mxu0 %v121
  %v257 = vpop.f32.mrb[0].mxu0
  %v258 = vadd.f32 %v72, %v257
  %v259 = vpop.f32.mrb[0].mxu0
  %v260 = vpop.f32.mrb[0].mxu0
  %v261 = vadd.f32 %v72, %v260
  %v262 = vpop.f32.mrb[0].mxu0
  %263 = vmatprep.mubr.bf16.mxu0 0
  %264 = vmatmul.mubr.bf16.gmra.mrb[0].mxu0 %v124
  %v265 = vpop.f32.mrb[0].mxu0
  %v266 = vadd.f32 %v72, %v265
  %v267 = vpop.f32.mrb[0].mxu0
  %v268 = vpop.f32.mrb[0].mxu0
  %v269 = vadd.f32 %v72, %v268
  %v270 = vpop.f32.mrb[0].mxu0
  %271 = vmatprep.mubr.bf16.mxu0 0
  %272 = vmatmul.mubr.bf16.gmra.mrb[0].mxu0 %v127
  %v273 = vpop.f32.mrb[0].mxu0
  %v274 = vadd.f32 %v72, %v273
  %v275 = vpop.f32.mrb[0].mxu0
  %v276 = vpop.f32.mrb[0].mxu0
  %v277 = vadd.f32 %v72, %v276
  %v278 = vpop.f32.mrb[0].mxu0
  %279 = vmatprep.mubr.bf16.mxu0 0
  %280 = vmatmul.mubr.bf16.gmra.mrb[0].mxu0 %v130
  %v281 = vpop.f32.mrb[0].mxu0
  %v282 = vadd.f32 %v72, %v281
  %v283 = vpop.f32.mrb[0].mxu0
  %v284 = vpop.f32.mrb[0].mxu0
  %v285 = vadd.f32 %v72, %v284
  %v286 = vpop.f32.mrb[0].mxu0
  %287 = vmatprep.mubr.bf16.mxu0 0
  %288 = vmatmul.mubr.bf16.gmra.mrb[0].mxu0 %v133
  %v289 = vpop.f32.mrb[0].mxu0
  %v290 = vadd.f32 %v72, %v289
  %v291 = vpop.f32.mrb[0].mxu0
  %v292 = vpop.f32.mrb[0].mxu0
  %v293 = vadd.f32 %v72, %v292
  %v294 = vpop.f32.mrb[0].mxu0
  %295 = vdwg.mxu0
  %v296 = vmax.f32 %v170, 0.0
  %v297 = vmax.f32 %v173, 0.0
  %v298 = vmax.f32 %v178, 0.0
  %v299 = vmax.f32 %v181, 0.0
  %v300 = vmax.f32 %v186, 0.0
  %v301 = vmax.f32 %v189, 0.0
  %v302 = vmax.f32 %v194, 0.0
  %v303 = vmax.f32 %v197, 0.0
  %v304 = vmax.f32 %v202, 0.0
  %v305 = vmax.f32 %v205, 0.0
  %v306 = vmax.f32 %v210, 0.0
  %v307 = vmax.f32 %v213, 0.0
  %v308 = vmax.f32 %v218, 0.0
  %v309 = vmax.f32 %v221, 0.0
  %v310 = vmax.f32 %v226, 0.0
  %v311 = vmax.f32 %v229, 0.0
  %v312 = vmax.f32 %v234, 0.0
  %v313 = vmax.f32 %v237, 0.0
  %v314 = vmax.f32 %v242, 0.0
  %v315 = vmax.f32 %v245, 0.0
  %v316 = vmax.f32 %v250, 0.0
  %v317 = vmax.f32 %v253, 0.0
  %v318 = vmax.f32 %v258, 0.0
  %v319 = vmax.f32 %v261, 0.0
  %v320 = vmax.f32 %v266, 0.0
  %v321 = vmax.f32 %v269, 0.0
  %v322 = vmax.f32 %v274, 0.0
  %v323 = vmax.f32 %v277, 0.0
  %v324 = vmax.f32 %v282, 0.0
  %v325 = vmax.f32 %v285, 0.0
  %v326 = vmax.f32 %v290, 0.0
  %v327 = vmax.f32 %v293, 0.0
  %v328 = vpack.c.bf16 %v297, %v296
  %v329 = vpack.c.bf16 %v299, %v298
  %v330 = vpack.c.bf16 %v301, %v300
  %v331 = vpack.c.bf16 %v303, %v302
  %v332 = vpack.c.bf16 %v305, %v304
  %v333 = vpack.c.bf16 %v307, %v306
  %v334 = vpack.c.bf16 %v309, %v308
  %v335 = vpack.c.bf16 %v311, %v310
  %v336 = vpack.c.bf16 %v313, %v312
  %v337 = vpack.c.bf16 %v315, %v314
  %v338 = vpack.c.bf16 %v317, %v316
  %v339 = vpack.c.bf16 %v319, %v318
  %v340 = vpack.c.bf16 %v321, %v320
  %v341 = vpack.c.bf16 %v323, %v322
  %v342 = vpack.c.bf16 %v325, %v324
  %v343 = vpack.c.bf16 %v327, %v326
  %s344 = scalar_lea.vmem %s1, 64
  %v345 = vld [vmem:[%s344] sm:$0xf]
  %v346 = vld [vmem:[%s344 + $0x4] sm:$0xf]
  %v347 = vld [vmem:[%s344 + $0x8] sm:$0xf]
  %v348 = vld [vmem:[%s344 + $0xc] sm:$0xf]
  %v349 = vld [vmem:[%s344 + $0x10] sm:$0xf]
  %v350 = vld [vmem:[%s344 + $0x14] sm:$0xf]
  %v351 = vld [vmem:[%s344 + $0x18] sm:$0xf]
  %v352 = vld [vmem:[%s344 + $0x1c] sm:$0xf]
  %v353 = vld [vmem:[%s344 + $0x20] sm:$0xf]
  %v354 = vld [vmem:[%s344 + $0x24] sm:$0xf]
  %v355 = vld [vmem:[%s344 + $0x28] sm:$0xf]
  %v356 = vld [vmem:[%s344 + $0x2c] sm:$0xf]
  %v357 = vld [vmem:[%s344 + $0x30] sm:$0xf]
  %v358 = vld [vmem:[%s344 + $0x34] sm:$0xf]
  %v359 = vld [vmem:[%s344 + $0x38] sm:$0xf]
  %v360 = vld [vmem:[%s344 + $0x3c] sm:$0xf]
  %s361 = scalar_lea.vmem %s2, 1
  %v362 = vld [vmem:[%s361] sm:$0x1]
  %v364 = vlaneseq
  %v365 = vshrl.u32 %v364, 7
  %v366 = vsub.s32 0, %v365
  %v367 = vrot.slane %v362, %v366
  %v385 = vunpack.c.l.b16 %v345
  %v386 = vunpack.c.l.b16 %v346
  %v387 = vunpack.c.l.b16 %v347
  %v388 = vunpack.c.l.b16 %v348
  %v389 = vunpack.c.l.b16 %v349
  %v390 = vunpack.c.l.b16 %v350
  %v391 = vunpack.c.l.b16 %v351
  %v392 = vunpack.c.l.b16 %v352
  %v393 = vunpack.c.l.b16 %v353
  %v394 = vunpack.c.l.b16 %v354
  %v395 = vunpack.c.l.b16 %v355
  %v396 = vunpack.c.l.b16 %v356
  %v397 = vunpack.c.l.b16 %v357
  %v398 = vunpack.c.l.b16 %v358
  %v399 = vunpack.c.l.b16 %v359
  %v400 = vunpack.c.l.b16 %v360
  %v401 = vpack.c.b16 %v386, %v385
  %v402 = vpack.c.b16 %v388, %v387
  %v403 = vpack.c.b16 %v390, %v389
  %v404 = vpack.c.b16 %v392, %v391
  %v405 = vpack.c.b16 %v394, %v393
  %v406 = vpack.c.b16 %v396, %v395
  %v407 = vpack.c.b16 %v398, %v397
  %v408 = vpack.c.b16 %v400, %v399
  %417 = vmatprep.subr.bf16.mxu0 0
  %418 = vmatpush1.bf16.msra.mxu0 %v401
  %419 = vmatprep.subr.bf16.mxu0 0
  %420 = vmatpush1.bf16.msra.mxu0 %v402
  %421 = vmatprep.subr.bf16.mxu0 0
  %422 = vmatpush1.bf16.msra.mxu0 %v403
  %423 = vmatprep.subr.bf16.mxu0 0
  %424 = vmatpush1.bf16.msra.mxu0 %v404
  %425 = vmatprep.subr.bf16.mxu0 0
  %426 = vmatpush1.bf16.msra.mxu0 %v405
  %427 = vmatprep.subr.bf16.mxu0 0
  %428 = vmatpush1.bf16.msra.mxu0 %v406
  %429 = vmatprep.subr.bf16.mxu0 0
  %430 = vmatpush1.bf16.msra.mxu0 %v407
  %431 = vmatprep.subr.bf16.mxu0 0
  %432 = vmatpush1.bf16.msra.mxu0 %v408
  %433 = vmatprep.subr.bf16.mxu0 0
  %434 = vmatpush1.bf16.msra.mxu0 0
  %435 = vmatprep.subr.bf16.mxu0 0
  %436 = vmatpush1.bf16.msra.mxu0 0
  %437 = vmatprep.subr.bf16.mxu0 0
  %438 = vmatpush1.bf16.msra.mxu0 0
  %439 = vmatprep.subr.bf16.mxu0 0
  %440 = vmatpush1.bf16.msra.mxu0 0
  %441 = vmatprep.subr.bf16.mxu0 0
  %442 = vmatpush1.bf16.msra.mxu0 0
  %443 = vmatprep.subr.bf16.mxu0 0
  %444 = vmatpush1.bf16.msra.mxu0 0
  %445 = vmatprep.subr.bf16.mxu0 0
  %446 = vmatpush1.bf16.msra.mxu0 0
  %447 = vmatprep.subr.bf16.mxu0 0
  %448 = vmatpush1.bf16.msra.mxu0 0
  %449 = vmatprep.mubr.bf16.mxu0 0
  %450 = vmatmul.mubr.bf16.gmra.mrb[0].mxu0 %v328
  %v451 = vpop.f32.mrb[0].mxu0
  %v452 = vadd.f32 %v367, %v451
  %v453 = vpop.f32.mrb[0].mxu0
  %v454 = vpop.f32.mrb[0].mxu0
  %v455 = vadd.f32 %v367, %v454
  %v456 = vpop.f32.mrb[0].mxu0
  %457 = vmatprep.mubr.bf16.mxu0 0
  %458 = vmatmul.mubr.bf16.gmra.mrb[0].mxu0 %v329
  %v459 = vpop.f32.mrb[0].mxu0
  %v460 = vadd.f32 %v367, %v459
  %v461 = vpop.f32.mrb[0].mxu0
  %v462 = vpop.f32.mrb[0].mxu0
  %v463 = vadd.f32 %v367, %v462
  %v464 = vpop.f32.mrb[0].mxu0
  %465 = vmatprep.mubr.bf16.mxu0 0
  %466 = vmatmul.mubr.bf16.gmra.mrb[0].mxu0 %v330
  %v467 = vpop.f32.mrb[0].mxu0
  %v468 = vadd.f32 %v367, %v467
  %v469 = vpop.f32.mrb[0].mxu0
  %v470 = vpop.f32.mrb[0].mxu0
  %v471 = vadd.f32 %v367, %v470
  %v472 = vpop.f32.mrb[0].mxu0
  %473 = vmatprep.mubr.bf16.mxu0 0
  %474 = vmatmul.mubr.bf16.gmra.mrb[0].mxu0 %v331
  %v475 = vpop.f32.mrb[0].mxu0
  %v476 = vadd.f32 %v367, %v475
  %v477 = vpop.f32.mrb[0].mxu0
  %v478 = vpop.f32.mrb[0].mxu0
  %v479 = vadd.f32 %v367, %v478
  %v480 = vpop.f32.mrb[0].mxu0
  %481 = vmatprep.mubr.bf16.mxu0 0
  %482 = vmatmul.mubr.bf16.gmra.mrb[0].mxu0 %v332
  %v483 = vpop.f32.mrb[0].mxu0
  %v484 = vadd.f32 %v367, %v483
  %v485 = vpop.f32.mrb[0].mxu0
  %v486 = vpop.f32.mrb[0].mxu0
  %v487 = vadd.f32 %v367, %v486
  %v488 = vpop.f32.mrb[0].mxu0
  %489 = vmatprep.mubr.bf16.mxu0 0
  %490 = vmatmul.mubr.bf16.gmra.mrb[0].mxu0 %v333
  %v491 = vpop.f32.mrb[0].mxu0
  %v492 = vadd.f32 %v367, %v491
  %v493 = vpop.f32.mrb[0].mxu0
  %v494 = vpop.f32.mrb[0].mxu0
  %v495 = vadd.f32 %v367, %v494
  %v496 = vpop.f32.mrb[0].mxu0
  %497 = vmatprep.mubr.bf16.mxu0 0
  %498 = vmatmul.mubr.bf16.gmra.mrb[0].mxu0 %v334
  %v499 = vpop.f32.mrb[0].mxu0
  %v500 = vadd.f32 %v367, %v499
  %v501 = vpop.f32.mrb[0].mxu0
  %v502 = vpop.f32.mrb[0].mxu0
  %v503 = vadd.f32 %v367, %v502
  %v504 = vpop.f32.mrb[0].mxu0
  %505 = vmatprep.mubr.bf16.mxu0 0
  %506 = vmatmul.mubr.bf16.gmra.mrb[0].mxu0 %v335
  %v507 = vpop.f32.mrb[0].mxu0
  %v508 = vadd.f32 %v367, %v507
  %v509 = vpop.f32.mrb[0].mxu0
  %v510 = vpop.f32.mrb[0].mxu0
  %v511 = vadd.f32 %v367, %v510
  %v512 = vpop.f32.mrb[0].mxu0
  %513 = vmatprep.mubr.bf16.mxu0 0
  %514 = vmatmul.mubr.bf16.gmra.mrb[0].mxu0 %v336
  %v515 = vpop.f32.mrb[0].mxu0
  %v516 = vadd.f32 %v367, %v515
  %v517 = vpop.f32.mrb[0].mxu0
  %v518 = vpop.f32.mrb[0].mxu0
  %v519 = vadd.f32 %v367, %v518
  %v520 = vpop.f32.mrb[0].mxu0
  %521 = vmatprep.mubr.bf16.mxu0 0
  %522 = vmatmul.mubr.bf16.gmra.mrb[0].mxu0 %v337
  %v523 = vpop.f32.mrb[0].mxu0
  %v524 = vadd.f32 %v367, %v523
  %v525 = vpop.f32.mrb[0].mxu0
  %v526 = vpop.f32.mrb[0].mxu0
  %v527 = vadd.f32 %v367, %v526
  %v528 = vpop.f32.mrb[0].mxu0
  %529 = vmatprep.mubr.bf16.mxu0 0
  %530 = vmatmul.mubr.bf16.gmra.mrb[0].mxu0 %v338
  %v531 = vpop.f32.mrb[0].mxu0
  %v532 = vadd.f32 %v367, %v531
  %v533 = vpop.f32.mrb[0].mxu0
  %v534 = vpop.f32.mrb[0].mxu0
  %v535 = vadd.f32 %v367, %v534
  %v536 = vpop.f32.mrb[0].mxu0
  %537 = vmatprep.mubr.bf16.mxu0 0
  %538 = vmatmul.mubr.bf16.gmra.mrb[0].mxu0 %v339
  %v539 = vpop.f32.mrb[0].mxu0
  %v540 = vadd.f32 %v367, %v539
  %v541 = vpop.f32.mrb[0].mxu0
  %v542 = vpop.f32.mrb[0].mxu0
  %v543 = vadd.f32 %v367, %v542
  %v544 = vpop.f32.mrb[0].mxu0
  %545 = vmatprep.mubr.bf16.mxu0 0
  %546 = vmatmul.mubr.bf16.gmra.mrb[0].mxu0 %v340
  %v547 = vpop.f32.mrb[0].mxu0
  %v548 = vadd.f32 %v367, %v547
  %v549 = vpop.f32.mrb[0].mxu0
  %v550 = vpop.f32.mrb[0].mxu0
  %v551 = vadd.f32 %v367, %v550
  %v552 = vpop.f32.mrb[0].mxu0
  %553 = vmatprep.mubr.bf16.mxu0 0
  %554 = vmatmul.mubr.bf16.gmra.mrb[0].mxu0 %v341
  %v555 = vpop.f32.mrb[0].mxu0
  %v556 = vadd.f32 %v367, %v555
  %v557 = vpop.f32.mrb[0].mxu0
  %v558 = vpop.f32.mrb[0].mxu0
  %v559 = vadd.f32 %v367, %v558
  %v560 = vpop.f32.mrb[0].mxu0
  %561 = vmatprep.mubr.bf16.mxu0 0
  %562 = vmatmul.mubr.bf16.gmra.mrb[0].mxu0 %v342
  %v563 = vpop.f32.mrb[0].mxu0
  %v564 = vadd.f32 %v367, %v563
  %v565 = vpop.f32.mrb[0].mxu0
  %v566 = vpop.f32.mrb[0].mxu0
  %v567 = vadd.f32 %v367, %v566
  %v568 = vpop.f32.mrb[0].mxu0
  %569 = vmatprep.mubr.bf16.mxu0 0
  %570 = vmatmul.mubr.bf16.gmra.mrb[0].mxu0 %v343
  %v571 = vpop.f32.mrb[0].mxu0
  %v572 = vadd.f32 %v367, %v571
  %v573 = vpop.f32.mrb[0].mxu0
  %v574 = vpop.f32.mrb[0].mxu0
  %v575 = vadd.f32 %v367, %v574
  %v576 = vpop.f32.mrb[0].mxu0
  %577 = vdwg.mxu0
  %v578 = vmax.f32 %v452, 0.0
  %v579 = vmax.f32 %v455, 0.0
  %v580 = vmax.f32 %v460, 0.0
  %v581 = vmax.f32 %v463, 0.0
  %v582 = vmax.f32 %v468, 0.0
  %v583 = vmax.f32 %v471, 0.0
  %v584 = vmax.f32 %v476, 0.0
  %v585 = vmax.f32 %v479, 0.0
  %v586 = vmax.f32 %v484, 0.0
  %v587 = vmax.f32 %v487, 0.0
  %v588 = vmax.f32 %v492, 0.0
  %v589 = vmax.f32 %v495, 0.0
  %v590 = vmax.f32 %v500, 0.0
  %v591 = vmax.f32 %v503, 0.0
  %v592 = vmax.f32 %v508, 0.0
  %v593 = vmax.f32 %v511, 0.0
  %v594 = vmax.f32 %v516, 0.0
  %v595 = vmax.f32 %v519, 0.0
  %v596 = vmax.f32 %v524, 0.0
  %v597 = vmax.f32 %v527, 0.0
  %v598 = vmax.f32 %v532, 0.0
  %v599 = vmax.f32 %v535, 0.0
  %v600 = vmax.f32 %v540, 0.0
  %v601 = vmax.f32 %v543, 0.0
  %v602 = vmax.f32 %v548, 0.0
  %v603 = vmax.f32 %v551, 0.0
  %v604 = vmax.f32 %v556, 0.0
  %v605 = vmax.f32 %v559, 0.0
  %v606 = vmax.f32 %v564, 0.0
  %v607 = vmax.f32 %v567, 0.0
  %v608 = vmax.f32 %v572, 0.0
  %v609 = vmax.f32 %v575, 0.0
  %v610 = vpack.c.bf16 %v579, %v578
  %v611 = vpack.c.bf16 %v581, %v580
  %v612 = vpack.c.bf16 %v583, %v582
  %v613 = vpack.c.bf16 %v585, %v584
  %v614 = vpack.c.bf16 %v587, %v586
  %v615 = vpack.c.bf16 %v589, %v588
  %v616 = vpack.c.bf16 %v591, %v590
  %v617 = vpack.c.bf16 %v593, %v592
  %v618 = vpack.c.bf16 %v595, %v594
  %v619 = vpack.c.bf16 %v597, %v596
  %v620 = vpack.c.bf16 %v599, %v598
  %v621 = vpack.c.bf16 %v601, %v600
  %v622 = vpack.c.bf16 %v603, %v602
  %v623 = vpack.c.bf16 %v605, %v604
  %v624 = vpack.c.bf16 %v607, %v606
  %v625 = vpack.c.bf16 %v609, %v608
  %s626 = scalar_lea.vmem %s1, 128
  %v627 = vld [vmem:[%s626] sm:$0xf]
  %v628 = vld [vmem:[%s626 + $0x4] sm:$0xf]
  %v629 = vld [vmem:[%s626 + $0x8] sm:$0xf]
  %v630 = vld [vmem:[%s626 + $0xc] sm:$0xf]
  %v631 = vld [vmem:[%s626 + $0x10] sm:$0xf]
  %v632 = vld [vmem:[%s626 + $0x14] sm:$0xf]
  %v633 = vld [vmem:[%s626 + $0x18] sm:$0xf]
  %v634 = vld [vmem:[%s626 + $0x1c] sm:$0xf]
  %v635 = vld [vmem:[%s626 + $0x20] sm:$0xf]
  %v636 = vld [vmem:[%s626 + $0x24] sm:$0xf]
  %v637 = vld [vmem:[%s626 + $0x28] sm:$0xf]
  %v638 = vld [vmem:[%s626 + $0x2c] sm:$0xf]
  %v639 = vld [vmem:[%s626 + $0x30] sm:$0xf]
  %v640 = vld [vmem:[%s626 + $0x34] sm:$0xf]
  %v641 = vld [vmem:[%s626 + $0x38] sm:$0xf]
  %v642 = vld [vmem:[%s626 + $0x3c] sm:$0xf]
  %s643 = scalar_lea.vmem %s2, 2
  %v644 = vld [vmem:[%s643] sm:$0x1]
  %v646 = vlaneseq
  %v647 = vshrl.u32 %v646, 7
  %v648 = vsub.s32 0, %v647
  %v649 = vrot.slane %v644, %v648
  %v667 = vunpack.c.l.b16 %v627
  %v668 = vunpack.c.l.b16 %v628
  %v669 = vunpack.c.l.b16 %v629
  %v670 = vunpack.c.l.b16 %v630
  %v671 = vunpack.c.l.b16 %v631
  %v672 = vunpack.c.l.b16 %v632
  %v673 = vunpack.c.l.b16 %v633
  %v674 = vunpack.c.l.b16 %v634
  %v675 = vunpack.c.l.b16 %v635
  %v676 = vunpack.c.l.b16 %v636
  %v677 = vunpack.c.l.b16 %v637
  %v678 = vunpack.c.l.b16 %v638
  %v679 = vunpack.c.l.b16 %v639
  %v680 = vunpack.c.l.b16 %v640
  %v681 = vunpack.c.l.b16 %v641
  %v682 = vunpack.c.l.b16 %v642
  %v683 = vpack.c.b16 %v668, %v667
  %v684 = vpack.c.b16 %v670, %v669
  %v685 = vpack.c.b16 %v672, %v671
  %v686 = vpack.c.b16 %v674, %v673
  %v687 = vpack.c.b16 %v676, %v675
  %v688 = vpack.c.b16 %v678, %v677
  %v689 = vpack.c.b16 %v680, %v679
  %v690 = vpack.c.b16 %v682, %v681
  %699 = vmatprep.subr.bf16.mxu0 0
  %700 = vmatpush1.bf16.msra.mxu0 %v683
  %701 = vmatprep.subr.bf16.mxu0 0
  %702 = vmatpush1.bf16.msra.mxu0 %v684
  %703 = vmatprep.subr.bf16.mxu0 0
  %704 = vmatpush1.bf16.msra.mxu0 %v685
  %705 = vmatprep.subr.bf16.mxu0 0
  %706 = vmatpush1.bf16.msra.mxu0 %v686
  %707 = vmatprep.subr.bf16.mxu0 0
  %708 = vmatpush1.bf16.msra.mxu0 %v687
  %709 = vmatprep.subr.bf16.mxu0 0
  %710 = vmatpush1.bf16.msra.mxu0 %v688
  %711 = vmatprep.subr.bf16.mxu0 0
  %712 = vmatpush1.bf16.msra.mxu0 %v689
  %713 = vmatprep.subr.bf16.mxu0 0
  %714 = vmatpush1.bf16.msra.mxu0 %v690
  %715 = vmatprep.subr.bf16.mxu0 0
  %716 = vmatpush1.bf16.msra.mxu0 0
  %717 = vmatprep.subr.bf16.mxu0 0
  %718 = vmatpush1.bf16.msra.mxu0 0
  %719 = vmatprep.subr.bf16.mxu0 0
  %720 = vmatpush1.bf16.msra.mxu0 0
  %721 = vmatprep.subr.bf16.mxu0 0
  %722 = vmatpush1.bf16.msra.mxu0 0
  %723 = vmatprep.subr.bf16.mxu0 0
  %724 = vmatpush1.bf16.msra.mxu0 0
  %725 = vmatprep.subr.bf16.mxu0 0
  %726 = vmatpush1.bf16.msra.mxu0 0
  %727 = vmatprep.subr.bf16.mxu0 0
  %728 = vmatpush1.bf16.msra.mxu0 0
  %729 = vmatprep.subr.bf16.mxu0 0
  %730 = vmatpush1.bf16.msra.mxu0 0
  %731 = vmatprep.mubr.bf16.mxu0 0
  %732 = vmatmul.mubr.bf16.gmra.mrb[0].mxu0 %v610
  %v733 = vpop.f32.mrb[0].mxu0
  %v734 = vadd.f32 %v649, %v733
  %v735 = vpop.f32.mrb[0].mxu0
  %v736 = vpop.f32.mrb[0].mxu0
  %v737 = vadd.f32 %v649, %v736
  %v738 = vpop.f32.mrb[0].mxu0
  %739 = vmatprep.mubr.bf16.mxu0 0
  %740 = vmatmul.mubr.bf16.gmra.mrb[0].mxu0 %v611
  %v741 = vpop.f32.mrb[0].mxu0
  %v742 = vadd.f32 %v649, %v741
  %v743 = vpop.f32.mrb[0].mxu0
  %v744 = vpop.f32.mrb[0].mxu0
  %v745 = vadd.f32 %v649, %v744
  %v746 = vpop.f32.mrb[0].mxu0
  %747 = vmatprep.mubr.bf16.mxu0 0
  %748 = vmatmul.mubr.bf16.gmra.mrb[0].mxu0 %v612
  %v749 = vpop.f32.mrb[0].mxu0
  %v750 = vadd.f32 %v649, %v749
  %v751 = vpop.f32.mrb[0].mxu0
  %v752 = vpop.f32.mrb[0].mxu0
  %v753 = vadd.f32 %v649, %v752
  %v754 = vpop.f32.mrb[0].mxu0
  %755 = vmatprep.mubr.bf16.mxu0 0
  %756 = vmatmul.mubr.bf16.gmra.mrb[0].mxu0 %v613
  %v757 = vpop.f32.mrb[0].mxu0
  %v758 = vadd.f32 %v649, %v757
  %v759 = vpop.f32.mrb[0].mxu0
  %v760 = vpop.f32.mrb[0].mxu0
  %v761 = vadd.f32 %v649, %v760
  %v762 = vpop.f32.mrb[0].mxu0
  %763 = vmatprep.mubr.bf16.mxu0 0
  %764 = vmatmul.mubr.bf16.gmra.mrb[0].mxu0 %v614
  %v765 = vpop.f32.mrb[0].mxu0
  %v766 = vadd.f32 %v649, %v765
  %v767 = vpop.f32.mrb[0].mxu0
  %v768 = vpop.f32.mrb[0].mxu0
  %v769 = vadd.f32 %v649, %v768
  %v770 = vpop.f32.mrb[0].mxu0
  %771 = vmatprep.mubr.bf16.mxu0 0
  %772 = vmatmul.mubr.bf16.gmra.mrb[0].mxu0 %v615
  %v773 = vpop.f32.mrb[0].mxu0
  %v774 = vadd.f32 %v649, %v773
  %v775 = vpop.f32.mrb[0].mxu0
  %v776 = vpop.f32.mrb[0].mxu0
  %v777 = vadd.f32 %v649, %v776
  %v778 = vpop.f32.mrb[0].mxu0
  %779 = vmatprep.mubr.bf16.mxu0 0
  %780 = vmatmul.mubr.bf16.gmra.mrb[0].mxu0 %v616
  %v781 = vpop.f32.mrb[0].mxu0
  %v782 = vadd.f32 %v649, %v781
  %v783 = vpop.f32.mrb[0].mxu0
  %v784 = vpop.f32.mrb[0].mxu0
  %v785 = vadd.f32 %v649, %v784
  %v786 = vpop.f32.mrb[0].mxu0
  %787 = vmatprep.mubr.bf16.mxu0 0
  %788 = vmatmul.mubr.bf16.gmra.mrb[0].mxu0 %v617
  %v789 = vpop.f32.mrb[0].mxu0
  %v790 = vadd.f32 %v649, %v789
  %v791 = vpop.f32.mrb[0].mxu0
  %v792 = vpop.f32.mrb[0].mxu0
  %v793 = vadd.f32 %v649, %v792
  %v794 = vpop.f32.mrb[0].mxu0
  %795 = vmatprep.mubr.bf16.mxu0 0
  %796 = vmatmul.mubr.bf16.gmra.mrb[0].mxu0 %v618
  %v797 = vpop.f32.mrb[0].mxu0
  %v798 = vadd.f32 %v649, %v797
  %v799 = vpop.f32.mrb[0].mxu0
  %v800 = vpop.f32.mrb[0].mxu0
  %v801 = vadd.f32 %v649, %v800
  %v802 = vpop.f32.mrb[0].mxu0
  %803 = vmatprep.mubr.bf16.mxu0 0
  %804 = vmatmul.mubr.bf16.gmra.mrb[0].mxu0 %v619
  %v805 = vpop.f32.mrb[0].mxu0
  %v806 = vadd.f32 %v649, %v805
  %v807 = vpop.f32.mrb[0].mxu0
  %v808 = vpop.f32.mrb[0].mxu0
  %v809 = vadd.f32 %v649, %v808
  %v810 = vpop.f32.mrb[0].mxu0
  %811 = vmatprep.mubr.bf16.mxu0 0
  %812 = vmatmul.mubr.bf16.gmra.mrb[0].mxu0 %v620
  %v813 = vpop.f32.mrb[0].mxu0
  %v814 = vadd.f32 %v649, %v813
  %v815 = vpop.f32.mrb[0].mxu0
  %v816 = vpop.f32.mrb[0].mxu0
  %v817 = vadd.f32 %v649, %v816
  %v818 = vpop.f32.mrb[0].mxu0
  %819 = vmatprep.mubr.bf16.mxu0 0
  %820 = vmatmul.mubr.bf16.gmra.mrb[0].mxu0 %v621
  %v821 = vpop.f32.mrb[0].mxu0
  %v822 = vadd.f32 %v649, %v821
  %v823 = vpop.f32.mrb[0].mxu0
  %v824 = vpop.f32.mrb[0].mxu0
  %v825 = vadd.f32 %v649, %v824
  %v826 = vpop.f32.mrb[0].mxu0
  %827 = vmatprep.mubr.bf16.mxu0 0
  %828 = vmatmul.mubr.bf16.gmra.mrb[0].mxu0 %v622
  %v829 = vpop.f32.mrb[0].mxu0
  %v830 = vadd.f32 %v649, %v829
  %v831 = vpop.f32.mrb[0].mxu0
  %v832 = vpop.f32.mrb[0].mxu0
  %v833 = vadd.f32 %v649, %v832
  %v834 = vpop.f32.mrb[0].mxu0
  %835 = vmatprep.mubr.bf16.mxu0 0
  %836 = vmatmul.mubr.bf16.gmra.mrb[0].mxu0 %v623
  %v837 = vpop.f32.mrb[0].mxu0
  %v838 = vadd.f32 %v649, %v837
  %v839 = vpop.f32.mrb[0].mxu0
  %v840 = vpop.f32.mrb[0].mxu0
  %v841 = vadd.f32 %v649, %v840
  %v842 = vpop.f32.mrb[0].mxu0
  %843 = vmatprep.mubr.bf16.mxu0 0
  %844 = vmatmul.mubr.bf16.gmra.mrb[0].mxu0 %v624
  %v845 = vpop.f32.mrb[0].mxu0
  %v846 = vadd.f32 %v649, %v845
  %v847 = vpop.f32.mrb[0].mxu0
  %v848 = vpop.f32.mrb[0].mxu0
  %v849 = vadd.f32 %v649, %v848
  %v850 = vpop.f32.mrb[0].mxu0
  %851 = vmatprep.mubr.bf16.mxu0 0
  %852 = vmatmul.mubr.bf16.gmra.mrb[0].mxu0 %v625
  %v853 = vpop.f32.mrb[0].mxu0
  %v854 = vadd.f32 %v649, %v853
  %v855 = vpop.f32.mrb[0].mxu0
  %v856 = vpop.f32.mrb[0].mxu0
  %v857 = vadd.f32 %v649, %v856
  %v858 = vpop.f32.mrb[0].mxu0
  %859 = vdwg.mxu0
  %v860 = vxor.u32 %v734, 2147483648
  %v861 = vxor.u32 %v737, 2147483648
  %v862 = vxor.u32 %v742, 2147483648
  %v863 = vxor.u32 %v745, 2147483648
  %v864 = vxor.u32 %v750, 2147483648
  %v865 = vxor.u32 %v753, 2147483648
  %v866 = vxor.u32 %v758, 2147483648
  %v867 = vxor.u32 %v761, 2147483648
  %v868 = vxor.u32 %v766, 2147483648
  %v869 = vxor.u32 %v769, 2147483648
  %v870 = vxor.u32 %v774, 2147483648
  %v871 = vxor.u32 %v777, 2147483648
  %v872 = vxor.u32 %v782, 2147483648
  %v873 = vxor.u32 %v785, 2147483648
  %v874 = vxor.u32 %v790, 2147483648
  %v875 = vxor.u32 %v793, 2147483648
  %v876 = vxor.u32 %v798, 2147483648
  %v877 = vxor.u32 %v801, 2147483648
  %v878 = vxor.u32 %v806, 2147483648
  %v879 = vxor.u32 %v809, 2147483648
  %v880 = vxor.u32 %v814, 2147483648
  %v881 = vxor.u32 %v817, 2147483648
  %v882 = vxor.u32 %v822, 2147483648
  %v883 = vxor.u32 %v825, 2147483648
  %v884 = vxor.u32 %v830, 2147483648
  %v885 = vxor.u32 %v833, 2147483648
  %v886 = vxor.u32 %v838, 2147483648
  %v887 = vxor.u32 %v841, 2147483648
  %v888 = vxor.u32 %v846, 2147483648
  %v889 = vxor.u32 %v849, 2147483648
  %v890 = vxor.u32 %v854, 2147483648
  %v891 = vxor.u32 %v857, 2147483648
  %v892 = vmul.f32 %v860, 1.442695
  %v893 = vpow.pop %v892
  %v894 = vmul.f32 %v861, 1.442695
  %v895 = vpow.pop %v894
  %v896 = vmul.f32 %v862, 1.442695
  %v897 = vpow.pop %v896
  %v898 = vmul.f32 %v863, 1.442695
  %v899 = vpow.pop %v898
  %v900 = vmul.f32 %v864, 1.442695
  %v901 = vpow.pop %v900
  %v902 = vmul.f32 %v865, 1.442695
  %v903 = vpow.pop %v902
  %v904 = vmul.f32 %v866, 1.442695
  %v905 = vpow.pop %v904
  %v906 = vmul.f32 %v867, 1.442695
  %v907 = vpow.pop %v906
  %v908 = vmul.f32 %v868, 1.442695
  %v909 = vpow.pop %v908
  %v910 = vmul.f32 %v869, 1.442695
  %v911 = vpow.pop %v910
  %v912 = vmul.f32 %v870, 1.442695
  %v913 = vpow.pop %v912
  %v914 = vmul.f32 %v871, 1.442695
  %v915 = vpow.pop %v914
  %v916 = vmul.f32 %v872, 1.442695
  %v917 = vpow.pop %v916
  %v918 = vmul.f32 %v873, 1.442695
  %v919 = vpow.pop %v918
  %v920 = vmul.f32 %v874, 1.442695
  %v921 = vpow.pop %v920
  %v922 = vmul.f32 %v875, 1.442695
  %v923 = vpow.pop %v922
  %v924 = vmul.f32 %v876, 1.442695
  %v925 = vpow.pop %v924
  %v926 = vmul.f32 %v877, 1.442695
  %v927 = vpow.pop %v926
  %v928 = vmul.f32 %v878, 1.442695
  %v929 = vpow.pop %v928
  %v930 = vmul.f32 %v879, 1.442695
  %v931 = vpow.pop %v930
  %v932 = vmul.f32 %v880, 1.442695
  %v933 = vpow.pop %v932
  %v934 = vmul.f32 %v881, 1.442695
  %v935 = vpow.pop %v934
  %v936 = vmul.f32 %v882, 1.442695
  %v937 = vpow.pop %v936
  %v938 = vmul.f32 %v883, 1.442695
  %v939 = vpow.pop %v938
  %v940 = vmul.f32 %v884, 1.442695
  %v941 = vpow.pop %v940
  %v942 = vmul.f32 %v885, 1.442695
  %v943 = vpow.pop %v942
  %v944 = vmul.f32 %v886, 1.442695
  %v945 = vpow.pop %v944
  %v946 = vmul.f32 %v887, 1.442695
  %v947 = vpow.pop %v946
  %v948 = vmul.f32 %v888, 1.442695
  %v949 = vpow.pop %v948
  %v950 = vmul.f32 %v889, 1.442695
  %v951 = vpow.pop %v950
  %v952 = vmul.f32 %v890, 1.442695
  %v953 = vpow.pop %v952
  %v954 = vmul.f32 %v891, 1.442695
  %v955 = vpow.pop %v954
  %v956 = vadd.f32 %v893, 1.0
  %v957 = vadd.f32 %v895, 1.0
  %v958 = vadd.f32 %v897, 1.0
  %v959 = vadd.f32 %v899, 1.0
  %v960 = vadd.f32 %v901, 1.0
  %v961 = vadd.f32 %v903, 1.0
  %v962 = vadd.f32 %v905, 1.0
  %v963 = vadd.f32 %v907, 1.0
  %v964 = vadd.f32 %v909, 1.0
  %v965 = vadd.f32 %v911, 1.0
  %v966 = vadd.f32 %v913, 1.0
  %v967 = vadd.f32 %v915, 1.0
  %v968 = vadd.f32 %v917, 1.0
  %v969 = vadd.f32 %v919, 1.0
  %v970 = vadd.f32 %v921, 1.0
  %v971 = vadd.f32 %v923, 1.0
  %v972 = vadd.f32 %v925, 1.0
  %v973 = vadd.f32 %v927, 1.0
  %v974 = vadd.f32 %v929, 1.0
  %v975 = vadd.f32 %v931, 1.0
  %v976 = vadd.f32 %v933, 1.0
  %v977 = vadd.f32 %v935, 1.0
  %v978 = vadd.f32 %v937, 1.0
  %v979 = vadd.f32 %v939, 1.0
  %v980 = vadd.f32 %v941, 1.0
  %v981 = vadd.f32 %v943, 1.0
  %v982 = vadd.f32 %v945, 1.0
  %v983 = vadd.f32 %v947, 1.0
  %v984 = vadd.f32 %v949, 1.0
  %v985 = vadd.f32 %v951, 1.0
  %v986 = vadd.f32 %v953, 1.0
  %v987 = vadd.f32 %v955, 1.0
  %v988 = vrcp.pop %v956
  %v989 = vmul.f32 1.0, %v988
  %v990 = vrcp.pop %v957
  %v991 = vmul.f32 1.0, %v990
  %v992 = vrcp.pop %v958
  %v993 = vmul.f32 1.0, %v992
  %v994 = vrcp.pop %v959
  %v995 = vmul.f32 1.0, %v994
  %v996 = vrcp.pop %v960
  %v997 = vmul.f32 1.0, %v996
  %v998 = vrcp.pop %v961
  %v999 = vmul.f32 1.0, %v998
  %v1000 = vrcp.pop %v962
  %v1001 = vmul.f32 1.0, %v1000
  %v1002 = vrcp.pop %v963
  %v1003 = vmul.f32 1.0, %v1002
  %v1004 = vrcp.pop %v964
  %v1005 = vmul.f32 1.0, %v1004
  %v1006 = vrcp.pop %v965
  %v1007 = vmul.f32 1.0, %v1006
  %v1008 = vrcp.pop %v966
  %v1009 = vmul.f32 1.0, %v1008
  %v1010 = vrcp.pop %v967
  %v1011 = vmul.f32 1.0, %v1010
  %v1012 = vrcp.pop %v968
  %v1013 = vmul.f32 1.0, %v1012
  %v1014 = vrcp.pop %v969
  %v1015 = vmul.f32 1.0, %v1014
  %v1016 = vrcp.pop %v970
  %v1017 = vmul.f32 1.0, %v1016
  %v1018 = vrcp.pop %v971
  %v1019 = vmul.f32 1.0, %v1018
  %v1020 = vrcp.pop %v972
  %v1021 = vmul.f32 1.0, %v1020
  %v1022 = vrcp.pop %v973
  %v1023 = vmul.f32 1.0, %v1022
  %v1024 = vrcp.pop %v974
  %v1025 = vmul.f32 1.0, %v1024
  %v1026 = vrcp.pop %v975
  %v1027 = vmul.f32 1.0, %v1026
  %v1028 = vrcp.pop %v976
  %v1029 = vmul.f32 1.0, %v1028
  %v1030 = vrcp.pop %v977
  %v1031 = vmul.f32 1.0, %v1030
  %v1032 = vrcp.pop %v978
  %v1033 = vmul.f32 1.0, %v1032
  %v1034 = vrcp.pop %v979
  %v1035 = vmul.f32 1.0, %v1034
  %v1036 = vrcp.pop %v980
  %v1037 = vmul.f32 1.0, %v1036
  %v1038 = vrcp.pop %v981
  %v1039 = vmul.f32 1.0, %v1038
  %v1040 = vrcp.pop %v982
  %v1041 = vmul.f32 1.0, %v1040
  %v1042 = vrcp.pop %v983
  %v1043 = vmul.f32 1.0, %v1042
  %v1044 = vrcp.pop %v984
  %v1045 = vmul.f32 1.0, %v1044
  %v1046 = vrcp.pop %v985
  %v1047 = vmul.f32 1.0, %v1046
  %v1048 = vrcp.pop %v986
  %v1049 = vmul.f32 1.0, %v1048
  %v1050 = vrcp.pop %v987
  %v1051 = vmul.f32 1.0, %v1050
  %1052 = vst [vmem:[%s3] sm:$0xff] %v989
  %1053 = vst [vmem:[%s3 + $0x8] sm:$0xff] %v991
  %1054 = vst [vmem:[%s3 + $0x10] sm:$0xff] %v993
  %1055 = vst [vmem:[%s3 + $0x18] sm:$0xff] %v995
  %1056 = vst [vmem:[%s3 + $0x20] sm:$0xff] %v997
  %1057 = vst [vmem:[%s3 + $0x28] sm:$0xff] %v999
  %1058 = vst [vmem:[%s3 + $0x30] sm:$0xff] %v1001
  %1059 = vst [vmem:[%s3 + $0x38] sm:$0xff] %v1003
  %1060 = vst [vmem:[%s3 + $0x40] sm:$0xff] %v1005
  %1061 = vst [vmem:[%s3 + $0x48] sm:$0xff] %v1007
  %1062 = vst [vmem:[%s3 + $0x50] sm:$0xff] %v1009
  %1063 = vst [vmem:[%s3 + $0x58] sm:$0xff] %v1011
  %1064 = vst [vmem:[%s3 + $0x60] sm:$0xff] %v1013
  %1065 = vst [vmem:[%s3 + $0x68] sm:$0xff] %v1015
  %1066 = vst [vmem:[%s3 + $0x70] sm:$0xff] %v1017
  %1067 = vst [vmem:[%s3 + $0x78] sm:$0xff] %v1019
  %1068 = vst [vmem:[%s3 + $0x80] sm:$0xff] %v1021
  %1069 = vst [vmem:[%s3 + $0x88] sm:$0xff] %v1023
  %1070 = vst [vmem:[%s3 + $0x90] sm:$0xff] %v1025
  %1071 = vst [vmem:[%s3 + $0x98] sm:$0xff] %v1027
  %1072 = vst [vmem:[%s3 + $0xa0] sm:$0xff] %v1029
  %1073 = vst [vmem:[%s3 + $0xa8] sm:$0xff] %v1031
  %1074 = vst [vmem:[%s3 + $0xb0] sm:$0xff] %v1033
  %1075 = vst [vmem:[%s3 + $0xb8] sm:$0xff] %v1035
  %1076 = vst [vmem:[%s3 + $0xc0] sm:$0xff] %v1037
  %1077 = vst [vmem:[%s3 + $0xc8] sm:$0xff] %v1039
  %1078 = vst [vmem:[%s3 + $0xd0] sm:$0xff] %v1041
  %1079 = vst [vmem:[%s3 + $0xd8] sm:$0xff] %v1043
  %1080 = vst [vmem:[%s3 + $0xe0] sm:$0xff] %v1045
  %1081 = vst [vmem:[%s3 + $0xe8] sm:$0xff] %v1047
  %1082 = vst [vmem:[%s3 + $0xf0] sm:$0xff] %v1049
  %1083 = vst [vmem:[%s3 + $0xf8] sm:$0xff] %v1051
  // Predicated region
  $region14: #{forward.1} parent=0 // pred_check
    _
  $region15: #{forward.1} parent=0 // pred_check_branch
    %1085 = sbr.rel (0) target = $region17
  $region16: #{forward.1} parent=0 // pred_region
    _
  $region17: #{forward.1} parent=0 // pred_fallthru
    _
  // Predicated region
  $region18: #{forward.1} parent=0 // pred_check
    _
  $region19: #{forward.1} parent=0 // pred_check_branch
    %1087 = sbr.rel (0) target = $region21
  $region20: #{forward.1} parent=0 // pred_region
    _
  $region21: #{forward.1} parent=0 // pred_fallthru
    _

</llo_original>
